<compile_context>
chip_gen: v7x
topology: tpu7x:2x2x1
jax: 0.10.0
libtpu: 0.0.40
codegen_flags: <defaults>
</compile_context>

<pallas_src>
import jax
import jax.numpy as jnp
from jax import lax
from jax.experimental import pallas as pl
from jax.experimental.pallas import tpu as pltpu


def _round_up(x, m):
    return (x + m - 1) // m * m


# ----------------------------------------------------------------------------
# Fused kernel: one grid step == one (state_i, layer_i) pair.
#   x_ref    : (1, in_pad, n_pad)        state_i, PyTorch layout (input_dim, N), zero padded
#   wt_ref   : (1, in_pad, out_pad)      W_i.T, zero padded
#   b_ref    : (1, 1, out_pad)           bias, zero padded
#   std_ref  : (1, 1, out_pad)           exp(log_std), padded with 1.0
#   eps_ref  : (1, n_pad, out_pad)       standard-normal noise (host generated)
# outputs (lane-dense, out_pad is a multiple of 128):
#   mean_ref : (1, n_pad, out_pad)       tanh(x.T @ wt + b)
#   samp_ref : (1, n_pad, out_pad)       mean + std * eps
# ----------------------------------------------------------------------------
def _grad_gen_fused_kernel(x_ref, wt_ref, b_ref, std_ref, eps_ref,
                           mean_ref, samp_ref):
    # Contract the state's leading (input_dim) axis directly: no wrapper transpose needed.
    pre = lax.dot_general(
        x_ref[0], wt_ref[0],
        dimension_numbers=(((0,), (0,)), ((), ())),
        preferred_element_type=jnp.float32)                 # (n_pad, out_pad), MXU
    mean = jnp.tanh(pre + b_ref[0])                         # EUP tanh
    mean_ref[0] = mean
    samp_ref[0] = mean + std_ref[0] * eps_ref[0]            # reparameterized sample


@jax.jit
def _grad_gen_fused(x_stk, wt_stk, b_stk, std_stk, eps_stk):
    num_l, in_pad, n_pad = x_stk.shape
    out_pad = wt_stk.shape[2]

    def blk(d1, d2):
        return pl.BlockSpec((1, d1, d2), lambda i: (i, 0, 0))

    return pl.pallas_call(
        _grad_gen_fused_kernel,
        out_shape=(
            jax.ShapeDtypeStruct((num_l, n_pad, out_pad), jnp.float32),   # mean
            jax.ShapeDtypeStruct((num_l, n_pad, out_pad), jnp.float32),   # sample
        ),
        grid_spec=pltpu.PrefetchScalarGridSpec(
            num_scalar_prefetch=0,
            grid=(num_l,),
            in_specs=[
                blk(in_pad, n_pad),     # states
                blk(in_pad, out_pad),   # weights (transposed)
                blk(1, out_pad),        # biases
                blk(1, out_pad),        # std = exp(log_std)
                blk(n_pad, out_pad),    # eps noise
            ],
            out_specs=[blk(n_pad, out_pad), blk(n_pad, out_pad)],
        ),
        compiler_params=pltpu.CompilerParams(
            # Layers are independent -> v7x's two TensorCores split this axis; no-op on v5e/v6e.
            dimension_semantics=("parallel",)),
    )(x_stk, wt_stk, b_stk, std_stk, eps_stk)


# ----------------------------------------------------------------------------
# Grad_gen module: parameter construction + 'tea'-mode forward
# ----------------------------------------------------------------------------
def init_grad_gen(key, num_layers, input_dim, hidden_dim, output_dim):
    """Deterministic parameter init matching Grad_gen.__init__.

    Every layer maps input_dim -> hidden_dim, except the last which maps
    input_dim -> output_dim.  Kaiming-normal (fan_in, relu gain) weights,
    zero biases, zero log_std1 / log_std2.
    """
    assert num_layers >= 2, "multi-layer (non linear_or_not) configuration"
    params = {"weights_t": [], "biases": []}
    gain_std = (2.0 / input_dim) ** 0.5                 # kaiming_normal_, nonlinearity='relu'
    keys = jax.random.split(key, num_layers)
    for i in range(num_layers):
        out_dim = output_dim if i == num_layers - 1 else hidden_dim
        w = gain_std * jax.random.normal(keys[i], (out_dim, input_dim), jnp.float32)
        params["weights_t"].append(jnp.transpose(w))            # (input_dim, out_dim)
        params["biases"].append(jnp.zeros((out_dim,), jnp.float32))
    params["log_std1"] = jnp.zeros((hidden_dim,), jnp.float32)
    params["log_std2"] = jnp.zeros((output_dim,), jnp.float32)
    return params


def grad_gen_forward_tea(params, state, noise_key):
    """Grad_gen.forward(state, mode='tea', select=False).

    state: list of arrays shaped (input_dim, N) (PyTorch convention; .t() handled in-kernel).
           All state tensors must share one shape (they are fused into a single pallas_call).
    Returns (grad, means): per-layer samples and per-layer distribution means.
    """
    num_state = len(state)
    num_layers = len(params["weights_t"])
    assert 1 <= num_state <= num_layers
    in_dim, n = state[0].shape
    for st in state:
        assert st.shape == (in_dim, n), "fused kernel requires identically-shaped state tensors"

    hidden_dim = params["log_std1"].shape[-1]
    output_dim = params["log_std2"].shape[-1]

    in_pad = _round_up(in_dim, 8)                       # sublane alignment
    n_pad = _round_up(n, 8)
    out_pad = _round_up(max(hidden_dim, output_dim), 128)   # lane-dense output stores

    noise_keys = jax.random.split(noise_key, num_state)

    x_l, wt_l, b_l, std_l, eps_l, out_dims = [], [], [], [], [], []
    for i, st in enumerate(state):
        is_last = (i == num_state - 1)
        logstd = params["log_std2"] if is_last else params["log_std1"]
        wt = params["weights_t"][i]                     # (in_dim, out_i)
        b = params["biases"][i]                         # (out_i,)
        out_i = wt.shape[1]
        out_dims.append(out_i)
        x_l.append(jnp.pad(st, ((0, in_pad - in_dim), (0, n_pad - n))))
        wt_l.append(jnp.pad(wt, ((0, in_pad - in_dim), (0, out_pad - out_i))))
        b_l.append(jnp.pad(b, ((0, out_pad - out_i),)).reshape(1, out_pad))
        std_l.append(jnp.pad(jnp.exp(logstd), ((0, out_pad - logstd.shape[-1]),),
                             constant_values=1.0).reshape(1, out_pad))
        eps_l.append(jax.random.normal(noise_keys[i], (n_pad, out_pad), jnp.float32))

    x_stk = jnp.stack(x_l)
    wt_stk = jnp.stack(wt_l)
    b_stk = jnp.stack(b_l)
    std_stk = jnp.stack(std_l)
    eps_stk = jnp.stack(eps_l)

    mean_stk, samp_stk = _grad_gen_fused(x_stk, wt_stk, b_stk, std_stk, eps_stk)

    grads, means, eps_used = [], [], []
    for i in range(num_state):
        grads.append(samp_stk[i, :n, :out_dims[i]])
        means.append(mean_stk[i, :n, :out_dims[i]])
        eps_used.append(eps_stk[i, :n, :out_dims[i]])
    return grads, means, eps_used


if __name__ == "__main__":
    # Small, module-consistent shapes
    num_layers = 3
    input_dim = 32
    hidden_dim = 32
    output_dim = 16
    batch_n = 8

    key = jax.random.PRNGKey(0)
    pkey, skey, nkey = jax.random.split(key, 3)

    params = init_grad_gen(pkey, num_layers, input_dim, hidden_dim, output_dim)

    # 'tea' mode pairs state tensor i with layer i -> len(state) == num_layers.
    # Each state tensor is (input_dim, N) as in PyTorch (transposed inside the kernel).
    state_keys = jax.random.split(skey, num_layers)
    state = [jax.random.normal(state_keys[i], (input_dim, batch_n), jnp.float32)
             for i in range(num_layers)]

    grads, means, eps_used = grad_gen_forward_tea(params, state, noise_key=nkey)
    grads = [jax.block_until_ready(g) for g in grads]
    means = [jax.block_until_ready(m) for m in means]

    # ---- verification against a pure-JAX reference (exact, since eps is explicit) ----
    for i in range(num_layers):
        is_last = (i == num_layers - 1)
        out_i = output_dim if is_last else hidden_dim
        wt, b = params["weights_t"][i], params["biases"][i]
        logstd = params["log_std2"] if is_last else params["log_std1"]
        std = jnp.exp(logstd)

        ref_mean = jnp.tanh(jnp.transpose(state[i]) @ wt + b)
        ref_samp = ref_mean + std * eps_used[i]

        assert means[i].shape == (batch_n, out_i), f"mean shape layer {i}"
        assert grads[i].shape == (batch_n, out_i), f"sample shape layer {i}"
        assert bool(jnp.all(jnp.isfinite(means[i]))), f"non-finite mean layer {i}"
        assert bool(jnp.all(jnp.isfinite(grads[i]))), f"non-finite sample layer {i}"
        assert jnp.allclose(means[i], ref_mean, atol=1e-4), f"mean mismatch layer {i}"
        assert jnp.allclose(grads[i], ref_samp, atol=1e-4), f"sample mismatch layer {i}"

    print("KERNEL_OK")
</pallas_src>

<mosaic_0001>
module attributes {stable_mosaic.version = 11 : i64} {
  func.func @_grad_gen_fused_kernel(%arg0: i32, %arg1: memref<1x32x8xf32, #tpu.memory_space<vmem>>, %arg2: memref<1x32x128xf32, #tpu.memory_space<vmem>>, %arg3: memref<1x1x128xf32, #tpu.memory_space<vmem>>, %arg4: memref<1x1x128xf32, #tpu.memory_space<vmem>>, %arg5: memref<1x8x128xf32, #tpu.memory_space<vmem>>, %arg6: memref<1x8x128xf32, #tpu.memory_space<vmem>>, %arg7: memref<1x8x128xf32, #tpu.memory_space<vmem>>) attributes {dimension_semantics = [#tpu.dimension_semantics<parallel>], iteration_bounds = array<i64: 3>, scalar_prefetch = 0 : i64, scratch_operands = 0 : i64, tpu.core_type = #tpu.core_type<tc>, window_params = [{transform_indices = @transform_0, window_bounds = array<i64: 1, 32, 8>}, {transform_indices = @transform_1, window_bounds = array<i64: 1, 32, 128>}, {transform_indices = @transform_2, window_bounds = array<i64: 1, 1, 128>}, {transform_indices = @transform_3, window_bounds = array<i64: 1, 1, 128>}, {transform_indices = @transform_4, window_bounds = array<i64: 1, 8, 128>}, {transform_indices = @transform_5, window_bounds = array<i64: 1, 8, 128>}, {transform_indices = @transform_6, window_bounds = array<i64: 1, 8, 128>}]} {
    %c0 = arith.constant 0 : index
    %c0_0 = arith.constant 0 : index
    %c0_1 = arith.constant 0 : index
    %0 = vector.load %arg1[%c0, %c0_0, %c0_1] : memref<1x32x8xf32, #tpu.memory_space<vmem>>, vector<1x32x8xf32>
    %1 = vector.shape_cast %0 : vector<1x32x8xf32> to vector<32x8xf32>
    %c0_2 = arith.constant 0 : index
    %c0_3 = arith.constant 0 : index
    %c0_4 = arith.constant 0 : index
    %2 = vector.load %arg2[%c0_2, %c0_3, %c0_4] : memref<1x32x128xf32, #tpu.memory_space<vmem>>, vector<1x32x128xf32>
    %3 = vector.shape_cast %2 : vector<1x32x128xf32> to vector<32x128xf32>
    %cst = arith.constant dense<0.000000e+00> : vector<8x128xf32>
    %4 = tpu.matmul %1, %3, %cst {dimension_numbers = #tpu.dot_dimension_numbers<[0], [0], [1], [1], [0, 1, 1, 1], [], []>} : vector<32x8xf32>, vector<32x128xf32>, vector<8x128xf32> -> vector<8x128xf32>
    %c0_5 = arith.constant 0 : index
    %c0_6 = arith.constant 0 : index
    %c0_7 = arith.constant 0 : index
    %5 = vector.load %arg3[%c0_5, %c0_6, %c0_7] : memref<1x1x128xf32, #tpu.memory_space<vmem>>, vector<1x1x128xf32>
    %6 = vector.shape_cast %5 : vector<1x1x128xf32> to vector<1x128xf32>
    %7 = vector.broadcast %6 : vector<1x128xf32> to vector<8x128xf32>
    %8 = arith.addf %4, %7 : vector<8x128xf32>
    %9 = math.tanh %8 : vector<8x128xf32>
    %c0_8 = arith.constant 0 : index
    %c0_9 = arith.constant 0 : index
    %c0_10 = arith.constant 0 : index
    %10 = vector.load %arg6[%c0_8, %c0_9, %c0_10] : memref<1x8x128xf32, #tpu.memory_space<vmem>>, vector<1x8x128xf32>
    %11 = vector.shape_cast %10 : vector<1x8x128xf32> to vector<8x128xf32>
    %12 = vector.shape_cast %9 : vector<8x128xf32> to vector<1x8x128xf32>
    tpu.vector_store %arg6[%c0_8, %c0_9, %c0_10], %12 {strides = array<i32>} : memref<1x8x128xf32, #tpu.memory_space<vmem>>, vector<1x8x128xf32>,
    %c0_11 = arith.constant 0 : index
    %c0_12 = arith.constant 0 : index
    %c0_13 = arith.constant 0 : index
    %13 = vector.load %arg4[%c0_11, %c0_12, %c0_13] : memref<1x1x128xf32, #tpu.memory_space<vmem>>, vector<1x1x128xf32>
    %14 = vector.shape_cast %13 : vector<1x1x128xf32> to vector<1x128xf32>
    %c0_14 = arith.constant 0 : index
    %c0_15 = arith.constant 0 : index
    %c0_16 = arith.constant 0 : index
    %15 = vector.load %arg5[%c0_14, %c0_15, %c0_16] : memref<1x8x128xf32, #tpu.memory_space<vmem>>, vector<1x8x128xf32>
    %16 = vector.shape_cast %15 : vector<1x8x128xf32> to vector<8x128xf32>
    %17 = vector.broadcast %14 : vector<1x128xf32> to vector<8x128xf32>
    %18 = arith.mulf %17, %16 : vector<8x128xf32>
    %19 = arith.addf %9, %18 : vector<8x128xf32>
    %c0_17 = arith.constant 0 : index
    %c0_18 = arith.constant 0 : index
    %c0_19 = arith.constant 0 : index
    %20 = vector.load %arg7[%c0_17, %c0_18, %c0_19] : memref<1x8x128xf32, #tpu.memory_space<vmem>>, vector<1x8x128xf32>
    %21 = vector.shape_cast %20 : vector<1x8x128xf32> to vector<8x128xf32>
    %22 = vector.shape_cast %19 : vector<8x128xf32> to vector<1x8x128xf32>
    tpu.vector_store %arg7[%c0_17, %c0_18, %c0_19], %22 {strides = array<i32>} : memref<1x8x128xf32, #tpu.memory_space<vmem>>, vector<1x8x128xf32>,
    return
  }
  func.func @transform_0(%arg0: i32) -> (i32, i32, i32) {
    %c0_i32 = arith.constant 0 : i32
    %c0_i32_0 = arith.constant 0 : i32
    %c0_i32_1 = arith.constant 0 : i32
    return %arg0, %c0_i32, %c0_i32_0 : i32, i32, i32
  }
  func.func @transform_1(%arg0: i32) -> (i32, i32, i32) {
    %c0_i32 = arith.constant 0 : i32
    %c0_i32_0 = arith.constant 0 : i32
    %c0_i32_1 = arith.constant 0 : i32
    return %arg0, %c0_i32, %c0_i32_0 : i32, i32, i32
  }
  func.func @transform_2(%arg0: i32) -> (i32, i32, i32) {
    %c0_i32 = arith.constant 0 : i32
    %c0_i32_0 = arith.constant 0 : i32
    %c0_i32_1 = arith.constant 0 : i32
    return %arg0, %c0_i32, %c0_i32_0 : i32, i32, i32
  }
  func.func @transform_3(%arg0: i32) -> (i32, i32, i32) {
    %c0_i32 = arith.constant 0 : i32
    %c0_i32_0 = arith.constant 0 : i32
    %c0_i32_1 = arith.constant 0 : i32
    return %arg0, %c0_i32, %c0_i32_0 : i32, i32, i32
  }
  func.func @transform_4(%arg0: i32) -> (i32, i32, i32) {
    %c0_i32 = arith.constant 0 : i32
    %c0_i32_0 = arith.constant 0 : i32
    %c0_i32_1 = arith.constant 0 : i32
    return %arg0, %c0_i32, %c0_i32_0 : i32, i32, i32
  }
  func.func @transform_5(%arg0: i32) -> (i32, i32, i32) {
    %c0_i32 = arith.constant 0 : i32
    %c0_i32_0 = arith.constant 0 : i32
    %c0_i32_1 = arith.constant 0 : i32
    return %arg0, %c0_i32, %c0_i32_0 : i32, i32, i32
  }
  func.func @transform_6(%arg0: i32) -> (i32, i32, i32) {
    %c0_i32 = arith.constant 0 : i32
    %c0_i32_0 = arith.constant 0 : i32
    %c0_i32_1 = arith.constant 0 : i32
    return %arg0, %c0_i32, %c0_i32_0 : i32, i32, i32
  }
}

</mosaic_0001>

<llo_original>
// kernel: _grad_gen_fused.1
$region0: #{_grad_gen_fused.1}
  #allocation0 [shape = 'u32[]', space=smem, size = 0x4, offset = 0x4, fixed_abs, tag = 'smem constant byte address 0x4 - core index']
  #allocation1 [shape = 'u32[144,128]{1,0:T(1,128)}', space=vmem, size = 0x12000, scoped, tag = 'internal scratch']
  %s0 = inlined_call_operand.vmem [shape: f32[3,32,8], index: 0, kind: input, shape index: {}]
  %s1 = inlined_call_operand.vmem [shape: f32[3,32,128], index: 1, kind: input, shape index: {}]
  %s2 = inlined_call_operand.vmem [shape: f32[3,1,128], index: 2, kind: input, shape index: {}]
  %s3 = inlined_call_operand.vmem [shape: f32[3,1,128], index: 3, kind: input, shape index: {}]
  %s4 = inlined_call_operand.vmem [shape: f32[3,8,128], index: 4, kind: input, shape index: {}]
  %s5 = inlined_call_operand.hbm [shape: f32[3,8,128], index: 5, kind: output, shape index: {0}]
  %s6 = inlined_call_operand.hbm [shape: f32[3,8,128], index: 6, kind: output, shape index: {1}]
  %7 = xla_tuple %s5, %s6
  %s8 = sld [smem:[#allocation0]]
  $region61: #{_grad_gen_fused.1} parent=0
    _
  %s10 = ssub.s32 1, %s8
  %s11 = scalar_select 0, %s10, %s8
  $region1: #{_grad_gen_fused.1} parent=0
    #allocation2 [shape = 'u8[8192]{0}', space=vmem, size = 0x2000, scoped, tag = 'output window, operand 0']
    #allocation3 [shape = 's32[2]{0}', space=sflag, size = 0x8, scoped, tag = 'scoped memory for _grad_gen_fused.1']
    #allocation4 [shape = 'u8[8192]{0}', space=vmem, size = 0x2000, scoped, tag = 'output window, operand 1']
    #allocation5 [shape = 's32[2]{0}', space=sflag, size = 0x8, scoped, tag = 'scoped memory for _grad_gen_fused.1']
    %12 = vsyncpa [#allocation3], 0
    %s13 = scalar_lea.sflag [#allocation3], 1
    %14 = vsyncpa %s13, 0
    %15 = vsyncpa [#allocation5], 0
    %s16 = scalar_lea.sflag [#allocation5], 1
    %17 = vsyncpa %s16, 0
    loop: start=0, step=1, limit=5
    $region2: #{_grad_gen_fused.1} parent=1 // loop_pre_header
      _
    $region3: #{_grad_gen_fused.1} parent=1 // loop_header
      %s19 = sphi 0, %s23
      %p20 = scmp.ge.s32.totalorder %s19, 5
      %s29 = sphi 0, %s31
      %s32 = sphi 0, %s29
      %s33 = sphi 0, %s32
      %s49 = sphi 0, %s33
      %s55 = sphi 0, %s57
      %s58 = sphi 0, %s55
      %s59 = sphi 0, %s58
      %s75 = sphi 0, %s59
      %s81 = sphi 0, %s83
      %s84 = sphi 0, %s81
      %s85 = sphi 0, %s84
      %s101 = sphi 0, %s85
      %s107 = sphi 0, %s109
      %s110 = sphi 0, %s107
      %s111 = sphi 0, %s110
      %s127 = sphi 0, %s111
      %s133 = sphi 0, %s135
      %s136 = sphi 0, %s133
      %s137 = sphi 0, %s136
      %s153 = sphi 0, %s137
      %s159 = sphi 0, %s161
      %s162 = sphi 0, %s159
      %s163 = sphi 0, %s162
      %s179 = sphi 0, %s163
      %s185 = sphi 0, %s187
      %s188 = sphi 0, %s185
      %s189 = sphi 0, %s188
      %s205 = sphi 0, %s189
    $region4: #{_grad_gen_fused.1} parent=1 // loop_header_branch
      %22 = sbr.rel (%p20) target = $region8
    $region5: #{_grad_gen_fused.1} parent=1 // loop_body
      %s24 = ssub.s32 %s19, 1
      %s25 = ssub.s32 %s19, 2
      %s26 = sadd.s32 %s19, 1
      %s27 = ssub.s32 %s19, %s26
      %p28 = scmp.eq.s32.totalorder %s27, 0
      %s30 = sadd.s32 %s29, 1
      %s31 = scalar_select %p28, %s29, %s30
      %p34 = pneg %p28
      %p35 = scmp.eq.s32.totalorder %s19, 2
      %p36 = por %p34, %p35
      %p37 = scmp.ne.s32.totalorder %s29, %s32
      %p38 = scmp.eq.s32.totalorder %s19, 0
      %p39 = por %p37, %p38
      %p40 = scmp.ne.s32.totalorder %s29, %s32
      %p41 = scmp.eq.s32.totalorder %s24, 2
      %p42 = por %p40, %p41
      %p43 = scmp.ne.s32.totalorder %s32, %s33
      %p44 = scmp.eq.s32.totalorder %s24, 0
      %p45 = por %p43, %p44
      %p46 = scmp.ne.s32.totalorder %s32, %s33
      %p47 = scmp.eq.s32.totalorder %s25, 2
      %p48 = por %p46, %p47
      %p50 = scmp.ne.s32.totalorder %s33, %s49
      %p51 = scmp.eq.s32.totalorder %s25, 0
      %p52 = por %p50, %p51
      %s53 = ssub.s32 %s19, %s26
      %p54 = scmp.eq.s32.totalorder %s53, 0
      %s56 = sadd.s32 %s55, 1
      %s57 = scalar_select %p54, %s55, %s56
      %p60 = pneg %p54
      %p61 = scmp.eq.s32.totalorder %s19, 2
      %p62 = por %p60, %p61
      %p63 = scmp.ne.s32.totalorder %s55, %s58
      %p64 = scmp.eq.s32.totalorder %s19, 0
      %p65 = por %p63, %p64
      %p66 = scmp.ne.s32.totalorder %s55, %s58
      %p67 = scmp.eq.s32.totalorder %s24, 2
      %p68 = por %p66, %p67
      %p69 = scmp.ne.s32.totalorder %s58, %s59
      %p70 = scmp.eq.s32.totalorder %s24, 0
      %p71 = por %p69, %p70
      %p72 = scmp.ne.s32.totalorder %s58, %s59
      %p73 = scmp.eq.s32.totalorder %s25, 2
      %p74 = por %p72, %p73
      %p76 = scmp.ne.s32.totalorder %s59, %s75
      %p77 = scmp.eq.s32.totalorder %s25, 0
      %p78 = por %p76, %p77
      %s79 = ssub.s32 %s19, %s26
      %p80 = scmp.eq.s32.totalorder %s79, 0
      %s82 = sadd.s32 %s81, 1
      %s83 = scalar_select %p80, %s81, %s82
      %p86 = pneg %p80
      %p87 = scmp.eq.s32.totalorder %s19, 2
      %p88 = por %p86, %p87
      %p89 = scmp.ne.s32.totalorder %s81, %s84
      %p90 = scmp.eq.s32.totalorder %s19, 0
      %p91 = por %p89, %p90
      %p92 = scmp.ne.s32.totalorder %s81, %s84
      %p93 = scmp.eq.s32.totalorder %s24, 2
      %p94 = por %p92, %p93
      %p95 = scmp.ne.s32.totalorder %s84, %s85
      %p96 = scmp.eq.s32.totalorder %s24, 0
      %p97 = por %p95, %p96
      %p98 = scmp.ne.s32.totalorder %s84, %s85
      %p99 = scmp.eq.s32.totalorder %s25, 2
      %p100 = por %p98, %p99
      %p102 = scmp.ne.s32.totalorder %s85, %s101
      %p103 = scmp.eq.s32.totalorder %s25, 0
      %p104 = por %p102, %p103
      %s105 = ssub.s32 %s19, %s26
      %p106 = scmp.eq.s32.totalorder %s105, 0
      %s108 = sadd.s32 %s107, 1
      %s109 = scalar_select %p106, %s107, %s108
      %p112 = pneg %p106
      %p113 = scmp.eq.s32.totalorder %s19, 2
      %p114 = por %p112, %p113
      %p115 = scmp.ne.s32.totalorder %s107, %s110
      %p116 = scmp.eq.s32.totalorder %s19, 0
      %p117 = por %p115, %p116
      %p118 = scmp.ne.s32.totalorder %s107, %s110
      %p119 = scmp.eq.s32.totalorder %s24, 2
      %p120 = por %p118, %p119
      %p121 = scmp.ne.s32.totalorder %s110, %s111
      %p122 = scmp.eq.s32.totalorder %s24, 0
      %p123 = por %p121, %p122
      %p124 = scmp.ne.s32.totalorder %s110, %s111
      %p125 = scmp.eq.s32.totalorder %s25, 2
      %p126 = por %p124, %p125
      %p128 = scmp.ne.s32.totalorder %s111, %s127
      %p129 = scmp.eq.s32.totalorder %s25, 0
      %p130 = por %p128, %p129
      %s131 = ssub.s32 %s19, %s26
      %p132 = scmp.eq.s32.totalorder %s131, 0
      %s134 = sadd.s32 %s133, 1
      %s135 = scalar_select %p132, %s133, %s134
      %p138 = pneg %p132
      %p139 = scmp.eq.s32.totalorder %s19, 2
      %p140 = por %p138, %p139
      %p141 = scmp.ne.s32.totalorder %s133, %s136
      %p142 = scmp.eq.s32.totalorder %s19, 0
      %p143 = por %p141, %p142
      %p144 = scmp.ne.s32.totalorder %s133, %s136
      %p145 = scmp.eq.s32.totalorder %s24, 2
      %p146 = por %p144, %p145
      %p147 = scmp.ne.s32.totalorder %s136, %s137
      %p148 = scmp.eq.s32.totalorder %s24, 0
      %p149 = por %p147, %p148
      %p150 = scmp.ne.s32.totalorder %s136, %s137
      %p151 = scmp.eq.s32.totalorder %s25, 2
      %p152 = por %p150, %p151
      %p154 = scmp.ne.s32.totalorder %s137, %s153
      %p155 = scmp.eq.s32.totalorder %s25, 0
      %p156 = por %p154, %p155
      %s157 = ssub.s32 %s19, %s26
      %p158 = scmp.eq.s32.totalorder %s157, 0
      %s160 = sadd.s32 %s159, 1
      %s161 = scalar_select %p158, %s159, %s160
      %p164 = pneg %p158
      %p165 = scmp.eq.s32.totalorder %s19, 2
      %p166 = por %p164, %p165
      %p167 = scmp.ne.s32.totalorder %s159, %s162
      %p168 = scmp.eq.s32.totalorder %s19, 0
      %p169 = por %p167, %p168
      %p170 = scmp.ne.s32.totalorder %s159, %s162
      %p171 = scmp.eq.s32.totalorder %s24, 2
      %p172 = por %p170, %p171
      %p173 = scmp.ne.s32.totalorder %s162, %s163
      %p174 = scmp.eq.s32.totalorder %s24, 0
      %p175 = por %p173, %p174
      %p176 = scmp.ne.s32.totalorder %s162, %s163
      %p177 = scmp.eq.s32.totalorder %s25, 2
      %p178 = por %p176, %p177
      %p180 = scmp.ne.s32.totalorder %s163, %s179
      %p181 = scmp.eq.s32.totalorder %s25, 0
      %p182 = por %p180, %p181
      %s183 = ssub.s32 %s19, %s26
      %p184 = scmp.eq.s32.totalorder %s183, 0
      %s186 = sadd.s32 %s185, 1
      %s187 = scalar_select %p184, %s185, %s186
      %p190 = pneg %p184
      %p191 = scmp.eq.s32.totalorder %s19, 2
      %p192 = por %p190, %p191
      %p193 = scmp.ne.s32.totalorder %s185, %s188
      %p194 = scmp.eq.s32.totalorder %s19, 0
      %p195 = por %p193, %p194
      %p196 = scmp.ne.s32.totalorder %s185, %s188
      %p197 = scmp.eq.s32.totalorder %s24, 2
      %p198 = por %p196, %p197
      %p199 = scmp.ne.s32.totalorder %s188, %s189
      %p200 = scmp.eq.s32.totalorder %s24, 0
      %p201 = por %p199, %p200
      %p202 = scmp.ne.s32.totalorder %s188, %s189
      %p203 = scmp.eq.s32.totalorder %s25, 2
      %p204 = por %p202, %p203
      %p206 = scmp.ne.s32.totalorder %s189, %s205
      %p207 = scmp.eq.s32.totalorder %s25, 0
      %p208 = por %p206, %p207
      %p209 = scmp.le.s32.totalorder 1, %s19
      %p210 = scmp.lt.s32.totalorder %s19, 4
      %p211 = pnand %p209, %p210
      %p212 = pneg %p211
      // Predicated region
      $region9: #{_grad_gen_fused.1} parent=5 // pred_check
        _
      $region10: #{_grad_gen_fused.1} parent=5 // pred_check_branch
        %214 = sbr.rel (%p211) target = $region12
      $region11: #{_grad_gen_fused.1} parent=5 // pred_region
        %s215 = ssub.s32 %s19, 1
      $region12: #{_grad_gen_fused.1} parent=5 // pred_fallthru
        _
      %p216 = scmp.lt.s32.totalorder %s19, 3
      // Predicated region
      $region13: #{_grad_gen_fused.1} parent=5 // pred_check
        %p217 = pneg %p216
      $region14: #{_grad_gen_fused.1} parent=5 // pred_check_branch
        %219 = sbr.rel (%p217) target = $region16
      $region15: #{_grad_gen_fused.1} parent=5 // pred_region
        // Predicated region
        $region17: #{_grad_gen_fused.1} parent=15 // pred_check
          %p220 = pneg %p39
        $region18: #{_grad_gen_fused.1} parent=15 // pred_check_branch
          %222 = sbr.rel (%p220) target = $region20
        $region19: #{_grad_gen_fused.1} parent=15 // pred_region
          %p223 = scmp.lt.s32.totalorder %s19, 2
          %s224 = scalar_select %p223, %s19, 2
          %s225 = smul.addr %s224, 4
          %s226 = smul.addr %s225, 8
          %s227 = scalar_lea.vmem %s0, %s226
        $region20: #{_grad_gen_fused.1} parent=15 // pred_fallthru
          _
        // Predicated region
        $region21: #{_grad_gen_fused.1} parent=15 // pred_check
          %p228 = pneg %p65
        $region22: #{_grad_gen_fused.1} parent=15 // pred_check_branch
          %230 = sbr.rel (%p228) target = $region24
        $region23: #{_grad_gen_fused.1} parent=15 // pred_region
          %p231 = scmp.lt.s32.totalorder %s19, 2
          %s232 = scalar_select %p231, %s19, 2
          %s233 = smul.addr %s232, 4
          %s234 = smul.addr %s233, 8
          %s235 = scalar_lea.vmem %s1, %s234
        $region24: #{_grad_gen_fused.1} parent=15 // pred_fallthru
          _
        // Predicated region
        $region25: #{_grad_gen_fused.1} parent=15 // pred_check
          %p236 = pneg %p91
        $region26: #{_grad_gen_fused.1} parent=15 // pred_check_branch
          %238 = sbr.rel (%p236) target = $region28
        $region27: #{_grad_gen_fused.1} parent=15 // pred_region
          %p239 = scmp.lt.s32.totalorder %s19, 2
          %s240 = scalar_select %p239, %s19, 2
          %s241 = scalar_lea.vmem %s2, %s240
        $region28: #{_grad_gen_fused.1} parent=15 // pred_fallthru
          _
        // Predicated region
        $region29: #{_grad_gen_fused.1} parent=15 // pred_check
          %p242 = pneg %p117
        $region30: #{_grad_gen_fused.1} parent=15 // pred_check_branch
          %244 = sbr.rel (%p242) target = $region32
        $region31: #{_grad_gen_fused.1} parent=15 // pred_region
          %p245 = scmp.lt.s32.totalorder %s19, 2
          %s246 = scalar_select %p245, %s19, 2
          %s247 = scalar_lea.vmem %s3, %s246
        $region32: #{_grad_gen_fused.1} parent=15 // pred_fallthru
          _
        // Predicated region
        $region33: #{_grad_gen_fused.1} parent=15 // pred_check
          %p248 = pneg %p143
        $region34: #{_grad_gen_fused.1} parent=15 // pred_check_branch
          %250 = sbr.rel (%p248) target = $region36
        $region35: #{_grad_gen_fused.1} parent=15 // pred_region
          %p251 = scmp.lt.s32.totalorder %s19, 2
          %s252 = scalar_select %p251, %s19, 2
          %s253 = smul.addr %s252, 8
          %s254 = scalar_lea.vmem %s4, %s253
        $region36: #{_grad_gen_fused.1} parent=15 // pred_fallthru
          _
      $region16: #{_grad_gen_fused.1} parent=5 // pred_fallthru
        _
      %p255 = scmp.le.s32.totalorder 1, %s19
      %p256 = scmp.lt.s32.totalorder %s19, 4
      %p257 = pnand %p255, %p256
      %p258 = pneg %p257
      // Predicated region
      $region37: #{_grad_gen_fused.1} parent=5 // pred_check
        _
      $region38: #{_grad_gen_fused.1} parent=5 // pred_check_branch
        %260 = sbr.rel (%p257) target = $region40
      $region39: #{_grad_gen_fused.1} parent=5 // pred_region
        %s261 = ssub.s32 %s19, 1
        %p262 = scmp.lt.s32.totalorder %s24, 2
        %s263 = scalar_select %p262, %s24, 2
        %s264 = smul.addr %s263, 4
        %s265 = smul.addr %s264, 8
        %s266 = scalar_lea.vmem %s0, %s265
        %p267 = pneg %p45
        %p268 = pneg %p42
        %p269 = scmp.lt.s32.totalorder %s24, 2
        %s270 = scalar_select %p269, %s24, 2
        %s271 = smul.addr %s270, 4
        %s272 = smul.addr %s271, 8
        %s273 = scalar_lea.vmem %s1, %s272
        %p274 = pneg %p71
        %p275 = pneg %p68
        %p276 = scmp.lt.s32.totalorder %s24, 2
        %s277 = scalar_select %p276, %s24, 2
        %s278 = scalar_lea.vmem %s2, %s277
        %p279 = pneg %p97
        %p280 = pneg %p94
        %p281 = scmp.lt.s32.totalorder %s24, 2
        %s282 = scalar_select %p281, %s24, 2
        %s283 = scalar_lea.vmem %s3, %s282
        %p284 = pneg %p123
        %p285 = pneg %p120
        %p286 = scmp.lt.s32.totalorder %s24, 2
        %s287 = scalar_select %p286, %s24, 2
        %s288 = smul.addr %s287, 8
        %s289 = scalar_lea.vmem %s4, %s288
        %p290 = pneg %p149
        %p291 = pneg %p146
        %p292 = pneg %p175
        %p293 = pneg %p172
        %s294 = sand.u32 %s162, 1
        %s295 = scalar_lea.sflag [#allocation3], %s294
        %s296 = sand.u32 %s162, 1
        %s297 = smul.addr %s296, 8
        %s298 = scalar_lea.vmem [#allocation2], %s297
        %p299 = pneg %p201
        %p300 = pneg %p198
        %s301 = sand.u32 %s188, 1
        %s302 = scalar_lea.sflag [#allocation5], %s301
        %s303 = sand.u32 %s188, 1
        %s304 = smul.addr %s303, 8
        %s305 = scalar_lea.vmem [#allocation4], %s304
        %p306 = scmp.lt.s32.totalorder %s24, 2
        %s307 = scalar_select %p306, %s24, 2
        %s308 = smul.addr %s307, 4
        %s309 = smul.addr %s308, 8
        %s310 = scalar_lea.vmem %s0, %s309
        %p311 = scmp.lt.s32.totalorder %s24, 2
        %s312 = scalar_select %p311, %s24, 2
        %s313 = smul.addr %s312, 4
        %s314 = smul.addr %s313, 8
        %s315 = scalar_lea.vmem %s1, %s314
        %p316 = scmp.lt.s32.totalorder %s24, 2
        %s317 = scalar_select %p316, %s24, 2
        %s318 = scalar_lea.vmem %s2, %s317
        %p319 = scmp.lt.s32.totalorder %s24, 2
        %s320 = scalar_select %p319, %s24, 2
        %s321 = scalar_lea.vmem %s3, %s320
        %p322 = scmp.lt.s32.totalorder %s24, 2
        %s323 = scalar_select %p322, %s24, 2
        %s324 = smul.addr %s323, 8
        %s325 = scalar_lea.vmem %s4, %s324
        %v326 = vld [vmem:[%s310] sm:$0xff]
        %v327 = vld [vmem:[%s310 + $0x8] sm:$0xff]
        %v328 = vld [vmem:[%s310 + $0x10] sm:$0xff]
        %v329 = vld [vmem:[%s310 + $0x18] sm:$0xff]
        %v330 = vld [vmem:[%s315] sm:$0xff]
        %v331 = vld [vmem:[%s315 + $0x8] sm:$0xff]
        %v332 = vld [vmem:[%s315 + $0x10] sm:$0xff]
        %v333 = vld [vmem:[%s315 + $0x18] sm:$0xff]
        %v334 = vld [vmem:[%s318] sm:$0x1]
        %v336 = vlaneseq
        %v337 = vshrl.u32 %v336, 7
        %v338 = vsub.s32 0, %v337
        %v339 = vrot.slane %v334, %v338
        %341 = vxpose.xlu0.b32.start [1/16] %v326, 128
        %342 = vxpose.xlu0.b32.cont [2/16] %v327, 128
        %343 = vxpose.xlu0.b32.cont [3/16] %v328, 128
        %344 = vxpose.xlu0.b32.cont [4/16] %v329, 128
        %345 = vxpose.xlu0.b32.cont [5/16] 0.0, 128
        %346 = vxpose.xlu0.b32.cont [6/16] 0.0, 128
        %347 = vxpose.xlu0.b32.cont [7/16] 0.0, 128
        %348 = vxpose.xlu0.b32.cont [8/16] 0.0, 128
        %349 = vxpose.xlu0.b32.cont [9/16] 0.0, 128
        %350 = vxpose.xlu0.b32.cont [10/16] 0.0, 128
        %351 = vxpose.xlu0.b32.cont [11/16] 0.0, 128
        %352 = vxpose.xlu0.b32.cont [12/16] 0.0, 128
        %353 = vxpose.xlu0.b32.cont [13/16] 0.0, 128
        %354 = vxpose.xlu0.b32.cont [14/16] 0.0, 128
        %355 = vxpose.xlu0.b32.cont [15/16] 0.0, 128
        %356 = vxpose.xlu0.b32.end [16/16] 0.0, 128
        %v357 = vpop.trf.xlu0
        %v358 = vpop.trf.xlu0
        %v359 = vpop.trf.xlu0
        %v360 = vpop.trf.xlu0
        %v361 = vpop.trf.xlu0
        %v362 = vpop.trf.xlu0
        %v363 = vpop.trf.xlu0
        %v364 = vpop.trf.xlu0
        %v365 = vpop.trf.xlu0
        %v366 = vpop.trf.xlu0
        %v367 = vpop.trf.xlu0
        %v368 = vpop.trf.xlu0
        %v369 = vpop.trf.xlu0
        %v370 = vpop.trf.xlu0
        %v371 = vpop.trf.xlu0
        %v372 = vpop.trf.xlu0
        %vm373 = vcmask 261120
        %v375 = vsel %vm373, %v357, 0
        %377 = vmatprep.subr.mxu0 0.0
        %378 = vmatpush1.msra.mxu0 %v330
        %379 = vmatprep.subr.mxu0 0.0
        %380 = vmatpush1.msra.mxu0 %v331
        %381 = vmatprep.subr.mxu0 0.0
        %382 = vmatpush1.msra.mxu0 %v332
        %383 = vmatprep.subr.mxu0 0.0
        %384 = vmatpush1.msra.mxu0 %v333
        %385 = vmatprep.subr.mxu0 0.0
        %386 = vmatpush1.msra.mxu0 0.0
        %387 = vmatprep.subr.mxu0 0.0
        %388 = vmatpush1.msra.mxu0 0.0
        %389 = vmatprep.subr.mxu0 0.0
        %390 = vmatpush1.msra.mxu0 0.0
        %391 = vmatprep.subr.mxu0 0.0
        %392 = vmatpush1.msra.mxu0 0.0
        %393 = vmatprep.subr.mxu0 0.0
        %394 = vmatpush1.msra.mxu0 0.0
        %395 = vmatprep.subr.mxu0 0.0
        %396 = vmatpush1.msra.mxu0 0.0
        %397 = vmatprep.subr.mxu0 0.0
        %398 = vmatpush1.msra.mxu0 0.0
        %399 = vmatprep.subr.mxu0 0.0
        %400 = vmatpush1.msra.mxu0 0.0
        %401 = vmatprep.subr.mxu0 0.0
        %402 = vmatpush1.msra.mxu0 0.0
        %403 = vmatprep.subr.mxu0 0.0
        %404 = vmatpush1.msra.mxu0 0.0
        %405 = vmatprep.subr.mxu0 0.0
        %406 = vmatpush1.msra.mxu0 0.0
        %407 = vmatprep.subr.mxu0 0.0
        %408 = vmatpush1.msra.mxu0 0.0
        %409 = vmatprep.subr.mxu0 0.0
        %410 = vmatpush1.msra.mxu0 0.0
        %411 = vmatprep.subr.mxu0 0.0
        %412 = vmatpush1.msra.mxu0 0.0
        %413 = vmatprep.subr.mxu0 0.0
        %414 = vmatpush1.msra.mxu0 0.0
        %415 = vmatprep.subr.mxu0 0.0
        %416 = vmatpush1.msra.mxu0 0.0
        %417 = vmatprep.subr.mxu0 0.0
        %418 = vmatpush1.msra.mxu0 0.0
        %419 = vmatprep.subr.mxu0 0.0
        %420 = vmatpush1.msra.mxu0 0.0
        %421 = vmatprep.subr.mxu0 0.0
        %422 = vmatpush1.msra.mxu0 0.0
        %423 = vmatprep.subr.mxu0 0.0
        %424 = vmatpush1.msra.mxu0 0.0
        %425 = vmatprep.subr.mxu0 0.0
        %426 = vmatpush1.msra.mxu0 0.0
        %427 = vmatprep.subr.mxu0 0.0
        %428 = vmatpush1.msra.mxu0 0.0
        %429 = vmatprep.subr.mxu0 0.0
        %430 = vmatpush1.msra.mxu0 0.0
        %431 = vmatprep.subr.mxu0 0.0
        %432 = vmatpush1.msra.mxu0 0.0
        %433 = vmatprep.subr.mxu0 0.0
        %434 = vmatpush1.msra.mxu0 0.0
        %435 = vmatprep.subr.mxu0 0.0
        %436 = vmatpush1.msra.mxu0 0.0
        %437 = vmatprep.subr.mxu0 0.0
        %438 = vmatpush1.msra.mxu0 0.0
        %439 = vmatprep.subr.mxu0 0.0
        %440 = vmatpush1.msra.mxu0 0.0
        %441 = vmatprep.mubr.f32.mxu0 0.0
        %442 = vmatmul.mubr.f32.gmra.mrb[0].mxu0 %v375
        %v443 = vpop.f32.mrb[0].mxu0
        %v444 = vadd.f32 %v339, %v443
        %v445 = vpop.f32.mrb[0].mxu0
        %446 = vdwg.mxu0
        %v447 = vtanh.pop %v444
        %448 = vst [vmem:[%s298] sm:$0xff] %v447
        %v449 = vld [vmem:[%s321] sm:$0x1]
        %v450 = vld [vmem:[%s325] sm:$0xff]
        %v452 = vlaneseq
        %v453 = vshrl.u32 %v452, 7
        %v454 = vsub.s32 0, %v453
        %v455 = vrot.slane %v449, %v454
        %v457 = vmul.f32 %v455, %v450
        %v458 = vadd.f32 %v447, %v457
        %459 = vst [vmem:[%s305] sm:$0xff] %v458
        %s460 = sand.u32 %s162, 1
        %s461 = scalar_lea.sflag [#allocation3], %s460
        %s462 = sand.u32 %s162, 1
        %s463 = smul.addr %s462, 8
        %s464 = scalar_lea.vmem [#allocation2], %s463
        %s465 = sand.u32 %s188, 1
        %s466 = scalar_lea.sflag [#allocation5], %s465
        %s467 = sand.u32 %s188, 1
        %s468 = smul.addr %s467, 8
        %s469 = scalar_lea.vmem [#allocation4], %s468
        // Predicated region
        $region41: #{_grad_gen_fused.1} parent=39 // pred_check
          %p470 = pneg %p172
        $region42: #{_grad_gen_fused.1} parent=39 // pred_check_branch
          %472 = sbr.rel (%p470) target = $region44
        $region43: #{_grad_gen_fused.1} parent=39 // pred_region
          %s474 = ssub.s32 128, 128
          %475 = vsyncadd %s461, %s474
          %s476 = smul.addr %s24, 128
          %s477 = scalar_lea.hbm %s5, %s476
          %s479 = sshll.u32 %s464, 4
          %s480 = int_to_ptr.vmem [resolvable:$true] %s479
          %482 = dma.vmem_to_hbm [thread:$0]  %s480, 128, %s477, %s461
        $region44: #{_grad_gen_fused.1} parent=39 // pred_fallthru
          _
        // Predicated region
        $region45: #{_grad_gen_fused.1} parent=39 // pred_check
          %p483 = pneg %p198
        $region46: #{_grad_gen_fused.1} parent=39 // pred_check_branch
          %485 = sbr.rel (%p483) target = $region48
        $region47: #{_grad_gen_fused.1} parent=39 // pred_region
          %s487 = ssub.s32 128, 128
          %488 = vsyncadd %s466, %s487
          %s489 = smul.addr %s24, 128
          %s490 = scalar_lea.hbm %s6, %s489
          %s492 = sshll.u32 %s469, 4
          %s493 = int_to_ptr.vmem [resolvable:$true] %s492
          %495 = dma.vmem_to_hbm [thread:$0]  %s493, 128, %s490, %s466
        $region48: #{_grad_gen_fused.1} parent=39 // pred_fallthru
          _
      $region40: #{_grad_gen_fused.1} parent=5 // pred_fallthru
        _
      %p496 = scmp.le.s32.totalorder 2, %s19
      // Predicated region
      $region49: #{_grad_gen_fused.1} parent=5 // pred_check
        %p497 = pneg %p496
      $region50: #{_grad_gen_fused.1} parent=5 // pred_check_branch
        %499 = sbr.rel (%p497) target = $region52
      $region51: #{_grad_gen_fused.1} parent=5 // pred_region
        %s500 = ssub.s32 %s19, 2
        // Predicated region
        $region53: #{_grad_gen_fused.1} parent=51 // pred_check
          %p501 = pneg %p178
        $region54: #{_grad_gen_fused.1} parent=51 // pred_check_branch
          %503 = sbr.rel (%p501) target = $region56
        $region55: #{_grad_gen_fused.1} parent=51 // pred_region
          %s504 = sand.u32 %s163, 1
          %s505 = scalar_lea.sflag [#allocation3], %s504
          %s506 = sand.u32 %s163, 1
          %s507 = smul.addr %s506, 8
          %s508 = scalar_lea.vmem [#allocation2], %s507
          %509 = dma.done %s505, 128
        $region56: #{_grad_gen_fused.1} parent=51 // pred_fallthru
          _
        // Predicated region
        $region57: #{_grad_gen_fused.1} parent=51 // pred_check
          %p510 = pneg %p204
        $region58: #{_grad_gen_fused.1} parent=51 // pred_check_branch
          %512 = sbr.rel (%p510) target = $region60
        $region59: #{_grad_gen_fused.1} parent=51 // pred_region
          %s513 = sand.u32 %s189, 1
          %s514 = scalar_lea.sflag [#allocation5], %s513
          %s515 = sand.u32 %s189, 1
          %s516 = smul.addr %s515, 8
          %s517 = scalar_lea.vmem [#allocation4], %s516
          %518 = dma.done %s514, 128
        $region60: #{_grad_gen_fused.1} parent=51 // pred_fallthru
          _
      $region52: #{_grad_gen_fused.1} parent=5 // pred_fallthru
        _
    $region6: #{_grad_gen_fused.1} parent=1 // loop_footer
      %s23 = sadd.s32 1, %s19
    $region7: #{_grad_gen_fused.1} parent=1 // loop_footer_branch
      %18 = sbr.rel target = $region3
    $region8: #{_grad_gen_fused.1} parent=1 // loop_exit
      _
    %519 = vsyncpa [#allocation3], 1
    %s520 = scalar_lea.sflag [#allocation3], 1
    %521 = vsyncpa %s520, 1
    %522 = vsyncpa [#allocation5], 1
    %s523 = scalar_lea.sflag [#allocation5], 1
    %524 = vsyncpa %s523, 1

</llo_original>
